<compile_context>
chip_gen: v7x
topology: tpu7x:2x2x1
jax: 0.10.0
libtpu: 0.0.40
codegen_flags: <defaults>
</compile_context>

<pallas_src>
import functools

import jax
import jax.numpy as jnp
from jax.experimental import pallas as pl
from jax.experimental.pallas import tpu as pltpu


def _round_up(x, m):
    return ((x + m - 1) // m) * m


def _encdec_kernel(x_ref,
                   w1, b1, w2, b2, w3, b3, w4, b4, w5, b5,
                   o_ref, *, apply_activation, chunk):
    """One (channels, pixel-tile) slab: encoder -> decoder -> softmax.

    x_ref : (1, in_ch, TP) f32      o_ref : (1, out_ch, TP) f32
    w*    : (out, in) bf16 matrices b*    : (out, 1) f32 biases
    Channels ride the sublane axis, pixels ride the (lane-dense) last axis.
    The pixel tile is processed in static `chunk`-lane slices so each layer's
    intermediate stays register-resident.
    """

    def mm(w_ref, h):
        # bf16 MXU operands (weights are pre-cast in the wrapper), f32 accumulation.
        return jnp.dot(w_ref[...], h.astype(jnp.bfloat16),
                       preferred_element_type=jnp.float32)

    def chain(x):
        # encoder: Conv1x1 + ReLU, Conv1x1 + ReLU
        h = jnp.maximum(mm(w1, x) + b1[...], 0.0)
        h = jnp.maximum(mm(w2, h) + b2[...], 0.0)
        # decoder: Conv1x1 + ReLU, Conv1x1 + ReLU, ConvTranspose1x1 (== linear)
        h = jnp.maximum(mm(w3, h) + b3[...], 0.0)
        h = jnp.maximum(mm(w4, h) + b4[...], 0.0)
        y = mm(w5, h) + b5[...]                          # (out_ch, chunk) f32
        if apply_activation:
            # softmax over channels (torch dim=1 of NCHW == sublane axis here);
            # exact normalization so probabilities sum to 1.
            m = jnp.max(y, axis=0, keepdims=True)
            e = jnp.exp(y - m)
            y = e / jnp.sum(e, axis=0, keepdims=True)
        return y

    tp = x_ref.shape[2]
    nfull, rem = divmod(tp, chunk)
    # Static (fully unrolled) chunk loop: static lane offsets, no dynamic slicing.
    for j in range(nfull):
        s = j * chunk
        o_ref[0, :, s:s + chunk] = chain(x_ref[0, :, s:s + chunk]).astype(o_ref.dtype)
    if rem:
        s = nfull * chunk
        o_ref[0, :, s:s + rem] = chain(x_ref[0, :, s:s + rem]).astype(o_ref.dtype)


def spectral_encoder_decoder(x_nchw, params, *, apply_activation=True,
                             tp=4096, chunk=512, pad_to_tile=False):
    """x_nchw: (N, C_in, H, W) float32.  Returns (N, C_out, H, W) float32."""
    n, c_in, hh, ww = x_nchw.shape
    c_out, nf = params["w5"].shape
    hw = hh * ww

    # Channel-major with merged pixels.  (Relayout at the boundary; see module note.)
    x3d = x_nchw.reshape(n, c_in, hw)

    # Pixel tile along the lane axis: multiple of 128, capped at `tp`.
    tp_eff = min(_round_up(tp, 128), _round_up(hw, 128))
    # Megacore: make sure there are >= 2 grid programs so v7x's 2 TCs both get work.
    while n * pl.cdiv(hw, tp_eff) < 2 and tp_eff > 128:
        tp_eff = max(128, _round_up(tp_eff // 2, 128))
    num_tiles = pl.cdiv(hw, tp_eff)
    chunk_eff = min(chunk, tp_eff)

    if pad_to_tile:
        pad = (-hw) % tp_eff
        if pad:
            x3d = jnp.pad(x3d, ((0, 0), (0, 0), (0, pad)))
        cols = hw + pad
    else:
        # Ragged last block: Pallas masks the edge-block writeback, and garbage
        # lanes can't contaminate valid ones (per-column independence).
        pad = 0
        cols = hw

    # Pre-cast weights to bf16 once (halves weight DMA/VMEM, removes per-step
    # casts); biases stay f32 for exact adds.
    weight_args = []
    for i in range(1, 6):
        weight_args.append(params[f"w{i}"].astype(jnp.bfloat16))
        weight_args.append(params[f"b{i}"])
    # All weights/biases are small 2-D arrays kept fully resident (constant index_map).
    weight_specs = [pl.BlockSpec(p.shape, lambda b, i: (0, 0)) for p in weight_args]

    flops = 2 * n * hw * (c_in * nf + 3 * nf * nf + nf * c_out)
    transc = n * hw * c_out if apply_activation else 0
    bytes_acc = (4 * n * cols * (c_in + c_out)
                 + sum(int(p.size) * p.dtype.itemsize for p in weight_args))

    kernel = functools.partial(_encdec_kernel,
                               apply_activation=apply_activation,
                               chunk=chunk_eff)

    out3d = pl.pallas_call(
        kernel,
        out_shape=jax.ShapeDtypeStruct((n, c_out, cols), jnp.float32),
        grid_spec=pltpu.PrefetchScalarGridSpec(
            num_scalar_prefetch=0,
            grid=(n, num_tiles),
            in_specs=[pl.BlockSpec((1, c_in, tp_eff), lambda b, i: (b, 0, i))]
                     + weight_specs,
            out_specs=pl.BlockSpec((1, c_out, tp_eff), lambda b, i: (b, 0, i)),
        ),
        compiler_params=pltpu.CompilerParams(
            dimension_semantics=("parallel", "parallel")),
        cost_estimate=pl.CostEstimate(flops=int(flops),
                                      transcendentals=int(transc),
                                      bytes_accessed=int(bytes_acc)),
    )(x3d, *weight_args)

    if pad_to_tile and pad:
        out3d = out3d[:, :, :hw]
    return out3d.reshape(n, c_out, hh, ww)


def init_params(key, in_ch, out_ch, num_filters):
    """Deterministic synthetic weights: 1x1 convs stored as (out, in) matrices."""
    keys = jax.random.split(key, 10)

    def lin(k, fin, fout):
        scale = 1.0 / jnp.sqrt(jnp.float32(fin))
        return jax.random.uniform(k, (fout, fin), jnp.float32, -scale, scale)

    def bias(k, fout):
        return jax.random.uniform(k, (fout, 1), jnp.float32, -0.1, 0.1)

    return {
        "w1": lin(keys[0], in_ch, num_filters),       "b1": bias(keys[1], num_filters),
        "w2": lin(keys[2], num_filters, num_filters), "b2": bias(keys[3], num_filters),
        "w3": lin(keys[4], num_filters, num_filters), "b3": bias(keys[5], num_filters),
        "w4": lin(keys[6], num_filters, num_filters), "b4": bias(keys[7], num_filters),
        "w5": lin(keys[8], num_filters, out_ch),      "b5": bias(keys[9], out_ch),
    }


def reference_forward(x_nchw, p, apply_activation=True, bf16_matmul=False):
    """Pure-JAX reference mirroring the PyTorch forward (channel-major layout)."""
    n, c, hh, ww = x_nchw.shape
    h = x_nchw.reshape(n, c, hh * ww)

    def mm(w, z):
        if bf16_matmul:
            return jnp.einsum("oi,nip->nop",
                              w.astype(jnp.bfloat16), z.astype(jnp.bfloat16),
                              preferred_element_type=jnp.float32)
        return jnp.einsum("oi,nip->nop", w, z)

    act = lambda z: jnp.maximum(z, 0.0)
    h = act(mm(p["w1"], h) + p["b1"][None])
    h = act(mm(p["w2"], h) + p["b2"][None])
    h = act(mm(p["w3"], h) + p["b3"][None])
    h = act(mm(p["w4"], h) + p["b4"][None])
    y = mm(p["w5"], h) + p["b5"][None]
    if apply_activation:
        y = jax.nn.softmax(y, axis=1)
    return y.reshape(n, -1, hh, ww)


if __name__ == "__main__":
    in_ch, out_ch, num_filters = 4, 4, 64
    batch, H, W = 2, 16, 16

    key = jax.random.PRNGKey(0)
    k_x, k_p = jax.random.split(key)
    x = jax.random.normal(k_x, (batch, in_ch, H, W), jnp.float32)
    params = init_params(k_p, in_ch, out_ch, num_filters)

    run = jax.jit(lambda xx, pp: spectral_encoder_decoder(xx, pp, apply_activation=True))
    out = jax.block_until_ready(run(x, params))
    assert out.shape == (batch, out_ch, H, W)

    # Tight check vs a reference using the same bf16-operand / f32-accum matmuls
    # (kernel softmax is now exactly normalized), loose check vs pure-f32 reference.
    ref_bf16 = reference_forward(x, params, True, bf16_matmul=True)
    ref_f32 = reference_forward(x, params, True, bf16_matmul=False)
    assert bool(jnp.allclose(out, ref_bf16, atol=2e-3)), "mismatch vs bf16 reference"
    assert bool(jnp.allclose(out, ref_f32, atol=3e-2)), "mismatch vs f32 reference"
    # Softmax outputs must sum to 1 over channels (exact-normalize check).
    assert bool(jnp.allclose(out.sum(axis=1), 1.0, atol=1e-5)), "softmax not normalized"

    # Also exercise the no-activation path (logits output).
    out_raw = jax.block_until_ready(
        spectral_encoder_decoder(x, params, apply_activation=False))
    ref_raw = reference_forward(x, params, False, bf16_matmul=True)
    assert bool(jnp.allclose(out_raw, ref_raw, atol=2e-2)), "mismatch (no activation)"

    print("KERNEL_OK")
</pallas_src>

<mosaic_0001>
module attributes {stable_mosaic.version = 11 : i64} {
  func.func @_encdec_kernel(%arg0: i32, %arg1: i32, %arg2: memref<1x4x256xf32, #tpu.memory_space<vmem>>, %arg3: memref<64x4xbf16, #tpu.memory_space<vmem>>, %arg4: memref<64x1xf32, #tpu.memory_space<vmem>>, %arg5: memref<64x64xbf16, #tpu.memory_space<vmem>>, %arg6: memref<64x1xf32, #tpu.memory_space<vmem>>, %arg7: memref<64x64xbf16, #tpu.memory_space<vmem>>, %arg8: memref<64x1xf32, #tpu.memory_space<vmem>>, %arg9: memref<64x64xbf16, #tpu.memory_space<vmem>>, %arg10: memref<64x1xf32, #tpu.memory_space<vmem>>, %arg11: memref<4x64xbf16, #tpu.memory_space<vmem>>, %arg12: memref<4x1xf32, #tpu.memory_space<vmem>>, %arg13: memref<1x4x256xf32, #tpu.memory_space<vmem>>) attributes {dimension_semantics = [#tpu.dimension_semantics<parallel>, #tpu.dimension_semantics<parallel>], iteration_bounds = array<i64: 2, 1>, scalar_prefetch = 0 : i64, scratch_operands = 0 : i64, tpu.core_type = #tpu.core_type<tc>, window_params = [{transform_indices = @transform_0, window_bounds = array<i64: 1, 4, 256>}, {pipeline_mode = #tpu.pipeline_mode<synchronous>, transform_indices = @transform_1, window_bounds = array<i64: 64, 4>}, {pipeline_mode = #tpu.pipeline_mode<synchronous>, transform_indices = @transform_2, window_bounds = array<i64: 64, 1>}, {pipeline_mode = #tpu.pipeline_mode<synchronous>, transform_indices = @transform_3, window_bounds = array<i64: 64, 64>}, {pipeline_mode = #tpu.pipeline_mode<synchronous>, transform_indices = @transform_4, window_bounds = array<i64: 64, 1>}, {pipeline_mode = #tpu.pipeline_mode<synchronous>, transform_indices = @transform_5, window_bounds = array<i64: 64, 64>}, {pipeline_mode = #tpu.pipeline_mode<synchronous>, transform_indices = @transform_6, window_bounds = array<i64: 64, 1>}, {pipeline_mode = #tpu.pipeline_mode<synchronous>, transform_indices = @transform_7, window_bounds = array<i64: 64, 64>}, {pipeline_mode = #tpu.pipeline_mode<synchronous>, transform_indices = @transform_8, window_bounds = array<i64: 64, 1>}, {pipeline_mode = #tpu.pipeline_mode<synchronous>, transform_indices = @transform_9, window_bounds = array<i64: 4, 64>}, {pipeline_mode = #tpu.pipeline_mode<synchronous>, transform_indices = @transform_10, window_bounds = array<i64: 4, 1>}, {transform_indices = @transform_11, window_bounds = array<i64: 1, 4, 256>}]} {
    %c0 = arith.constant 0 : index
    %c0_0 = arith.constant 0 : index
    %c0_1 = arith.constant 0 : index
    %0 = vector.load %arg2[%c0, %c0_0, %c0_1] : memref<1x4x256xf32, #tpu.memory_space<vmem>>, vector<1x4x256xf32>
    %1 = vector.shape_cast %0 : vector<1x4x256xf32> to vector<4x256xf32>
    %c0_2 = arith.constant 0 : index
    %c0_3 = arith.constant 0 : index
    %2 = vector.load %arg3[%c0_2, %c0_3] : memref<64x4xbf16, #tpu.memory_space<vmem>>, vector<64x4xbf16>
    %3 = arith.truncf %1 : vector<4x256xf32> to vector<4x256xbf16>
    %cst = arith.constant dense<0.000000e+00> : vector<64x256xf32>
    %4 = tpu.matmul %2, %3, %cst {dimension_numbers = #tpu.dot_dimension_numbers<[1], [0], [0], [1], [0, 0, 1, 1], [], []>} : vector<64x4xbf16>, vector<4x256xbf16>, vector<64x256xf32> -> vector<64x256xf32>
    %c0_4 = arith.constant 0 : index
    %c0_5 = arith.constant 0 : index
    %5 = vector.load %arg4[%c0_4, %c0_5] : memref<64x1xf32, #tpu.memory_space<vmem>>, vector<64x1xf32>
    %6 = vector.broadcast %5 : vector<64x1xf32> to vector<64x256xf32>
    %7 = arith.addf %4, %6 : vector<64x256xf32>
    %cst_6 = arith.constant 0.000000e+00 : f32
    %8 = vector.broadcast %cst_6 : f32 to vector<64x256xf32>
    %9 = arith.maximumf %7, %8 : vector<64x256xf32>
    %c0_7 = arith.constant 0 : index
    %c0_8 = arith.constant 0 : index
    %10 = vector.load %arg5[%c0_7, %c0_8] : memref<64x64xbf16, #tpu.memory_space<vmem>>, vector<64x64xbf16>
    %11 = arith.truncf %9 : vector<64x256xf32> to vector<64x256xbf16>
    %cst_9 = arith.constant dense<0.000000e+00> : vector<64x256xf32>
    %12 = tpu.matmul %10, %11, %cst_9 {dimension_numbers = #tpu.dot_dimension_numbers<[1], [0], [0], [1], [0, 0, 1, 1], [], []>} : vector<64x64xbf16>, vector<64x256xbf16>, vector<64x256xf32> -> vector<64x256xf32>
    %c0_10 = arith.constant 0 : index
    %c0_11 = arith.constant 0 : index
    %13 = vector.load %arg6[%c0_10, %c0_11] : memref<64x1xf32, #tpu.memory_space<vmem>>, vector<64x1xf32>
    %14 = vector.broadcast %13 : vector<64x1xf32> to vector<64x256xf32>
    %15 = arith.addf %12, %14 : vector<64x256xf32>
    %cst_12 = arith.constant 0.000000e+00 : f32
    %16 = vector.broadcast %cst_12 : f32 to vector<64x256xf32>
    %17 = arith.maximumf %15, %16 : vector<64x256xf32>
    %c0_13 = arith.constant 0 : index
    %c0_14 = arith.constant 0 : index
    %18 = vector.load %arg7[%c0_13, %c0_14] : memref<64x64xbf16, #tpu.memory_space<vmem>>, vector<64x64xbf16>
    %19 = arith.truncf %17 : vector<64x256xf32> to vector<64x256xbf16>
    %cst_15 = arith.constant dense<0.000000e+00> : vector<64x256xf32>
    %20 = tpu.matmul %18, %19, %cst_15 {dimension_numbers = #tpu.dot_dimension_numbers<[1], [0], [0], [1], [0, 0, 1, 1], [], []>} : vector<64x64xbf16>, vector<64x256xbf16>, vector<64x256xf32> -> vector<64x256xf32>
    %c0_16 = arith.constant 0 : index
    %c0_17 = arith.constant 0 : index
    %21 = vector.load %arg8[%c0_16, %c0_17] : memref<64x1xf32, #tpu.memory_space<vmem>>, vector<64x1xf32>
    %22 = vector.broadcast %21 : vector<64x1xf32> to vector<64x256xf32>
    %23 = arith.addf %20, %22 : vector<64x256xf32>
    %cst_18 = arith.constant 0.000000e+00 : f32
    %24 = vector.broadcast %cst_18 : f32 to vector<64x256xf32>
    %25 = arith.maximumf %23, %24 : vector<64x256xf32>
    %c0_19 = arith.constant 0 : index
    %c0_20 = arith.constant 0 : index
    %26 = vector.load %arg9[%c0_19, %c0_20] : memref<64x64xbf16, #tpu.memory_space<vmem>>, vector<64x64xbf16>
    %27 = arith.truncf %25 : vector<64x256xf32> to vector<64x256xbf16>
    %cst_21 = arith.constant dense<0.000000e+00> : vector<64x256xf32>
    %28 = tpu.matmul %26, %27, %cst_21 {dimension_numbers = #tpu.dot_dimension_numbers<[1], [0], [0], [1], [0, 0, 1, 1], [], []>} : vector<64x64xbf16>, vector<64x256xbf16>, vector<64x256xf32> -> vector<64x256xf32>
    %c0_22 = arith.constant 0 : index
    %c0_23 = arith.constant 0 : index
    %29 = vector.load %arg10[%c0_22, %c0_23] : memref<64x1xf32, #tpu.memory_space<vmem>>, vector<64x1xf32>
    %30 = vector.broadcast %29 : vector<64x1xf32> to vector<64x256xf32>
    %31 = arith.addf %28, %30 : vector<64x256xf32>
    %cst_24 = arith.constant 0.000000e+00 : f32
    %32 = vector.broadcast %cst_24 : f32 to vector<64x256xf32>
    %33 = arith.maximumf %31, %32 : vector<64x256xf32>
    %c0_25 = arith.constant 0 : index
    %c0_26 = arith.constant 0 : index
    %34 = vector.load %arg11[%c0_25, %c0_26] : memref<4x64xbf16, #tpu.memory_space<vmem>>, vector<4x64xbf16>
    %35 = arith.truncf %33 : vector<64x256xf32> to vector<64x256xbf16>
    %cst_27 = arith.constant dense<0.000000e+00> : vector<4x256xf32>
    %36 = tpu.matmul %34, %35, %cst_27 {dimension_numbers = #tpu.dot_dimension_numbers<[1], [0], [0], [1], [0, 0, 1, 1], [], []>} : vector<4x64xbf16>, vector<64x256xbf16>, vector<4x256xf32> -> vector<4x256xf32>
    %c0_28 = arith.constant 0 : index
    %c0_29 = arith.constant 0 : index
    %37 = vector.load %arg12[%c0_28, %c0_29] : memref<4x1xf32, #tpu.memory_space<vmem>>, vector<4x1xf32>
    %38 = vector.broadcast %37 : vector<4x1xf32> to vector<4x256xf32>
    %39 = arith.addf %36, %38 : vector<4x256xf32>
    %cst_30 = arith.constant dense<0xFF800000> : vector<256xf32>
    %40 = vector.multi_reduction <maximumf>, %39, %cst_30 [0] : vector<4x256xf32> to vector<256xf32>
    %41 = vector.shape_cast %40 : vector<256xf32> to vector<1x256xf32>
    %42 = vector.broadcast %41 : vector<1x256xf32> to vector<4x256xf32>
    %43 = arith.subf %39, %42 : vector<4x256xf32>
    %44 = math.exp %43 : vector<4x256xf32>
    %cst_31 = arith.constant dense<0.000000e+00> : vector<256xf32>
    %45 = vector.multi_reduction <add>, %44, %cst_31 [0] : vector<4x256xf32> to vector<256xf32>
    %46 = vector.shape_cast %45 : vector<256xf32> to vector<1x256xf32>
    %47 = vector.broadcast %46 : vector<1x256xf32> to vector<4x256xf32>
    %48 = arith.divf %44, %47 : vector<4x256xf32>
    %c0_32 = arith.constant 0 : index
    %c0_33 = arith.constant 0 : index
    %c0_34 = arith.constant 0 : index
    %49 = vector.load %arg13[%c0_32, %c0_33, %c0_34] : memref<1x4x256xf32, #tpu.memory_space<vmem>>, vector<1x4x256xf32>
    %50 = vector.shape_cast %49 : vector<1x4x256xf32> to vector<4x256xf32>
    %51 = vector.shape_cast %48 : vector<4x256xf32> to vector<1x4x256xf32>
    tpu.vector_store %arg13[%c0_32, %c0_33, %c0_34], %51 {strides = array<i32>} : memref<1x4x256xf32, #tpu.memory_space<vmem>>, vector<1x4x256xf32>,
    return
  }
  func.func @transform_0(%arg0: i32, %arg1: i32) -> (i32, i32, i32) {
    %c0_i32 = arith.constant 0 : i32
    %c0_i32_0 = arith.constant 0 : i32
    return %arg0, %c0_i32, %arg1 : i32, i32, i32
  }
  func.func @transform_1(%arg0: i32, %arg1: i32) -> (i32, i32) {
    %c0_i32 = arith.constant 0 : i32
    %c0_i32_0 = arith.constant 0 : i32
    %c0_i32_1 = arith.constant 0 : i32
    return %c0_i32, %c0_i32_0 : i32, i32
  }
  func.func @transform_2(%arg0: i32, %arg1: i32) -> (i32, i32) {
    %c0_i32 = arith.constant 0 : i32
    %c0_i32_0 = arith.constant 0 : i32
    %c0_i32_1 = arith.constant 0 : i32
    return %c0_i32, %c0_i32_0 : i32, i32
  }
  func.func @transform_3(%arg0: i32, %arg1: i32) -> (i32, i32) {
    %c0_i32 = arith.constant 0 : i32
    %c0_i32_0 = arith.constant 0 : i32
    %c0_i32_1 = arith.constant 0 : i32
    return %c0_i32, %c0_i32_0 : i32, i32
  }
  func.func @transform_4(%arg0: i32, %arg1: i32) -> (i32, i32) {
    %c0_i32 = arith.constant 0 : i32
    %c0_i32_0 = arith.constant 0 : i32
    %c0_i32_1 = arith.constant 0 : i32
    return %c0_i32, %c0_i32_0 : i32, i32
  }
  func.func @transform_5(%arg0: i32, %arg1: i32) -> (i32, i32) {
    %c0_i32 = arith.constant 0 : i32
    %c0_i32_0 = arith.constant 0 : i32
    %c0_i32_1 = arith.constant 0 : i32
    return %c0_i32, %c0_i32_0 : i32, i32
  }
  func.func @transform_6(%arg0: i32, %arg1: i32) -> (i32, i32) {
    %c0_i32 = arith.constant 0 : i32
    %c0_i32_0 = arith.constant 0 : i32
    %c0_i32_1 = arith.constant 0 : i32
    return %c0_i32, %c0_i32_0 : i32, i32
  }
  func.func @transform_7(%arg0: i32, %arg1: i32) -> (i32, i32) {
    %c0_i32 = arith.constant 0 : i32
    %c0_i32_0 = arith.constant 0 : i32
    %c0_i32_1 = arith.constant 0 : i32
    return %c0_i32, %c0_i32_0 : i32, i32
  }
  func.func @transform_8(%arg0: i32, %arg1: i32) -> (i32, i32) {
    %c0_i32 = arith.constant 0 : i32
    %c0_i32_0 = arith.constant 0 : i32
    %c0_i32_1 = arith.constant 0 : i32
    return %c0_i32, %c0_i32_0 : i32, i32
  }
  func.func @transform_9(%arg0: i32, %arg1: i32) -> (i32, i32) {
    %c0_i32 = arith.constant 0 : i32
    %c0_i32_0 = arith.constant 0 : i32
    %c0_i32_1 = arith.constant 0 : i32
    return %c0_i32, %c0_i32_0 : i32, i32
  }
  func.func @transform_10(%arg0: i32, %arg1: i32) -> (i32, i32) {
    %c0_i32 = arith.constant 0 : i32
    %c0_i32_0 = arith.constant 0 : i32
    %c0_i32_1 = arith.constant 0 : i32
    return %c0_i32, %c0_i32_0 : i32, i32
  }
  func.func @transform_11(%arg0: i32, %arg1: i32) -> (i32, i32, i32) {
    %c0_i32 = arith.constant 0 : i32
    %c0_i32_0 = arith.constant 0 : i32
    return %arg0, %c0_i32, %arg1 : i32, i32, i32
  }
}

</mosaic_0001>

<llo_original>
// kernel: _lambda_.1
$region0: #{_lambda_.1}
  #allocation0 [shape = 'u32[]', space=smem, size = 0x4, offset = 0x4, fixed_abs, tag = 'smem constant byte address 0x4 - core index']
  #allocation1 [shape = 'u32[144,128]{1,0:T(1,128)}', space=vmem, size = 0x12000, scoped, tag = 'internal scratch']
  %s0 = inlined_call_operand.vmem [shape: f32[2,4,256], index: 0, kind: input, shape index: {}]
  %s1 = inlined_call_operand.vmem [shape: bf16[64,4], index: 1, kind: input, shape index: {}]
  %s2 = inlined_call_operand.vmem [shape: f32[64,1], index: 2, kind: input, shape index: {}]
  %s3 = inlined_call_operand.vmem [shape: bf16[64,64], index: 3, kind: input, shape index: {}]
  %s4 = inlined_call_operand.vmem [shape: f32[64,1], index: 4, kind: input, shape index: {}]
  %s5 = inlined_call_operand.vmem [shape: bf16[64,64], index: 5, kind: input, shape index: {}]
  %s6 = inlined_call_operand.vmem [shape: f32[64,1], index: 6, kind: input, shape index: {}]
  %s7 = inlined_call_operand.vmem [shape: bf16[64,64], index: 7, kind: input, shape index: {}]
  %s8 = inlined_call_operand.vmem [shape: f32[64,1], index: 8, kind: input, shape index: {}]
  %s9 = inlined_call_operand.vmem [shape: bf16[4,64], index: 9, kind: input, shape index: {}]
  %s10 = inlined_call_operand.vmem [shape: f32[4,1], index: 10, kind: input, shape index: {}]
  %s11 = inlined_call_operand.vmem [shape: f32[2,4,256], index: 11, kind: output, shape index: {}]
  %s12 = sld [smem:[#allocation0]]
  $region77: #{_lambda_.1} parent=0
    _
  %s14 = ssub.s32 1, %s12
  %s15 = scalar_select 0, %s14, %s12
  loop: start=0, step=1, limit=4
  $region2: #{_lambda_.1} parent=0 // loop_pre_header
    _
  $region3: #{_lambda_.1} parent=0 // loop_header
    %s17 = sphi 0, %s21
    %p18 = scmp.ge.s32.totalorder %s17, 4
    %s24 = sphi 0, %s36
    %s25 = sphi 0, %s32
    %s26 = sphi 0, %s24
    %s27 = sphi 0, %s25
    %s28 = sphi 0, %s26
    %s29 = sphi 0, %s27
    %s41 = sphi 0, %s43
    %s44 = sphi 0, %s41
    %s45 = sphi 0, %s44
    %s61 = sphi 0, %s45
    %s65 = sphi 0, %s65
    %s67 = sphi 0, %s65
    %s68 = sphi 0, %s67
    %s82 = sphi 0, %s68
    %s86 = sphi 0, %s86
    %s88 = sphi 0, %s86
    %s89 = sphi 0, %s88
    %s103 = sphi 0, %s89
    %s107 = sphi 0, %s107
    %s109 = sphi 0, %s107
    %s110 = sphi 0, %s109
    %s124 = sphi 0, %s110
    %s128 = sphi 0, %s128
    %s130 = sphi 0, %s128
    %s131 = sphi 0, %s130
    %s145 = sphi 0, %s131
    %s149 = sphi 0, %s149
    %s151 = sphi 0, %s149
    %s152 = sphi 0, %s151
    %s166 = sphi 0, %s152
    %s170 = sphi 0, %s170
    %s172 = sphi 0, %s170
    %s173 = sphi 0, %s172
    %s187 = sphi 0, %s173
    %s191 = sphi 0, %s191
    %s193 = sphi 0, %s191
    %s194 = sphi 0, %s193
    %s208 = sphi 0, %s194
    %s212 = sphi 0, %s212
    %s214 = sphi 0, %s212
    %s215 = sphi 0, %s214
    %s229 = sphi 0, %s215
    %s233 = sphi 0, %s233
    %s235 = sphi 0, %s233
    %s236 = sphi 0, %s235
    %s250 = sphi 0, %s236
    %s254 = sphi 0, %s254
    %s256 = sphi 0, %s254
    %s257 = sphi 0, %s256
    %s271 = sphi 0, %s257
    %s279 = sphi 0, %s281
    %s282 = sphi 0, %s279
    %s283 = sphi 0, %s282
    %s299 = sphi 0, %s283
  $region4: #{_lambda_.1} parent=0 // loop_header_branch
    %20 = sbr.rel (%p18) target = $region8
  $region5: #{_lambda_.1} parent=0 // loop_body
    %s22 = ssub.s32 %s17, 1
    %s23 = ssub.s32 %s17, 2
    %s30 = sadd.s32 1, %s25
    %p31 = scmp.ge.s32.totalorder %s30, 1
    %s32 = scalar_select %p31, 0, %s30
    %s33 = sadd.s32 1, %s24
    %s34 = scalar_select %p31, %s33, %s24
    %p35 = scmp.ge.s32.totalorder %s34, 2
    %s36 = scalar_select %p35, 0, %s34
    %s37 = ssub.s32 %s24, %s36
    %s38 = ssub.s32 %s25, %s32
    %s39 = sor.u32 %s37, %s38
    %p40 = scmp.eq.s32.totalorder %s39, 0
    %s42 = sadd.s32 %s41, 1
    %s43 = scalar_select %p40, %s41, %s42
    %p46 = pneg %p40
    %p47 = scmp.eq.s32.totalorder %s17, 1
    %p48 = por %p46, %p47
    %p49 = scmp.ne.s32.totalorder %s41, %s44
    %p50 = scmp.eq.s32.totalorder %s17, 0
    %p51 = por %p49, %p50
    %p52 = scmp.ne.s32.totalorder %s41, %s44
    %p53 = scmp.eq.s32.totalorder %s22, 1
    %p54 = por %p52, %p53
    %p55 = scmp.ne.s32.totalorder %s44, %s45
    %p56 = scmp.eq.s32.totalorder %s22, 0
    %p57 = por %p55, %p56
    %p58 = scmp.ne.s32.totalorder %s44, %s45
    %p59 = scmp.eq.s32.totalorder %s23, 1
    %p60 = por %p58, %p59
    %p62 = scmp.ne.s32.totalorder %s45, %s61
    %p63 = scmp.eq.s32.totalorder %s23, 0
    %p64 = por %p62, %p63
    %s66 = sadd.s32 %s65, 1
    %p69 = scmp.eq.s32.totalorder %s17, 1
    %p70 = scmp.ne.s32.totalorder %s65, %s67
    %p71 = scmp.eq.s32.totalorder %s17, 0
    %p72 = por %p70, %p71
    %p73 = scmp.ne.s32.totalorder %s65, %s67
    %p74 = scmp.eq.s32.totalorder %s22, 1
    %p75 = por %p73, %p74
    %p76 = scmp.ne.s32.totalorder %s67, %s68
    %p77 = scmp.eq.s32.totalorder %s22, 0
    %p78 = por %p76, %p77
    %p79 = scmp.ne.s32.totalorder %s67, %s68
    %p80 = scmp.eq.s32.totalorder %s23, 1
    %p81 = por %p79, %p80
    %p83 = scmp.ne.s32.totalorder %s68, %s82
    %p84 = scmp.eq.s32.totalorder %s23, 0
    %p85 = por %p83, %p84
    %s87 = sadd.s32 %s86, 1
    %p90 = scmp.eq.s32.totalorder %s17, 1
    %p91 = scmp.ne.s32.totalorder %s86, %s88
    %p92 = scmp.eq.s32.totalorder %s17, 0
    %p93 = por %p91, %p92
    %p94 = scmp.ne.s32.totalorder %s86, %s88
    %p95 = scmp.eq.s32.totalorder %s22, 1
    %p96 = por %p94, %p95
    %p97 = scmp.ne.s32.totalorder %s88, %s89
    %p98 = scmp.eq.s32.totalorder %s22, 0
    %p99 = por %p97, %p98
    %p100 = scmp.ne.s32.totalorder %s88, %s89
    %p101 = scmp.eq.s32.totalorder %s23, 1
    %p102 = por %p100, %p101
    %p104 = scmp.ne.s32.totalorder %s89, %s103
    %p105 = scmp.eq.s32.totalorder %s23, 0
    %p106 = por %p104, %p105
    %s108 = sadd.s32 %s107, 1
    %p111 = scmp.eq.s32.totalorder %s17, 1
    %p112 = scmp.ne.s32.totalorder %s107, %s109
    %p113 = scmp.eq.s32.totalorder %s17, 0
    %p114 = por %p112, %p113
    %p115 = scmp.ne.s32.totalorder %s107, %s109
    %p116 = scmp.eq.s32.totalorder %s22, 1
    %p117 = por %p115, %p116
    %p118 = scmp.ne.s32.totalorder %s109, %s110
    %p119 = scmp.eq.s32.totalorder %s22, 0
    %p120 = por %p118, %p119
    %p121 = scmp.ne.s32.totalorder %s109, %s110
    %p122 = scmp.eq.s32.totalorder %s23, 1
    %p123 = por %p121, %p122
    %p125 = scmp.ne.s32.totalorder %s110, %s124
    %p126 = scmp.eq.s32.totalorder %s23, 0
    %p127 = por %p125, %p126
    %s129 = sadd.s32 %s128, 1
    %p132 = scmp.eq.s32.totalorder %s17, 1
    %p133 = scmp.ne.s32.totalorder %s128, %s130
    %p134 = scmp.eq.s32.totalorder %s17, 0
    %p135 = por %p133, %p134
    %p136 = scmp.ne.s32.totalorder %s128, %s130
    %p137 = scmp.eq.s32.totalorder %s22, 1
    %p138 = por %p136, %p137
    %p139 = scmp.ne.s32.totalorder %s130, %s131
    %p140 = scmp.eq.s32.totalorder %s22, 0
    %p141 = por %p139, %p140
    %p142 = scmp.ne.s32.totalorder %s130, %s131
    %p143 = scmp.eq.s32.totalorder %s23, 1
    %p144 = por %p142, %p143
    %p146 = scmp.ne.s32.totalorder %s131, %s145
    %p147 = scmp.eq.s32.totalorder %s23, 0
    %p148 = por %p146, %p147
    %s150 = sadd.s32 %s149, 1
    %p153 = scmp.eq.s32.totalorder %s17, 1
    %p154 = scmp.ne.s32.totalorder %s149, %s151
    %p155 = scmp.eq.s32.totalorder %s17, 0
    %p156 = por %p154, %p155
    %p157 = scmp.ne.s32.totalorder %s149, %s151
    %p158 = scmp.eq.s32.totalorder %s22, 1
    %p159 = por %p157, %p158
    %p160 = scmp.ne.s32.totalorder %s151, %s152
    %p161 = scmp.eq.s32.totalorder %s22, 0
    %p162 = por %p160, %p161
    %p163 = scmp.ne.s32.totalorder %s151, %s152
    %p164 = scmp.eq.s32.totalorder %s23, 1
    %p165 = por %p163, %p164
    %p167 = scmp.ne.s32.totalorder %s152, %s166
    %p168 = scmp.eq.s32.totalorder %s23, 0
    %p169 = por %p167, %p168
    %s171 = sadd.s32 %s170, 1
    %p174 = scmp.eq.s32.totalorder %s17, 1
    %p175 = scmp.ne.s32.totalorder %s170, %s172
    %p176 = scmp.eq.s32.totalorder %s17, 0
    %p177 = por %p175, %p176
    %p178 = scmp.ne.s32.totalorder %s170, %s172
    %p179 = scmp.eq.s32.totalorder %s22, 1
    %p180 = por %p178, %p179
    %p181 = scmp.ne.s32.totalorder %s172, %s173
    %p182 = scmp.eq.s32.totalorder %s22, 0
    %p183 = por %p181, %p182
    %p184 = scmp.ne.s32.totalorder %s172, %s173
    %p185 = scmp.eq.s32.totalorder %s23, 1
    %p186 = por %p184, %p185
    %p188 = scmp.ne.s32.totalorder %s173, %s187
    %p189 = scmp.eq.s32.totalorder %s23, 0
    %p190 = por %p188, %p189
    %s192 = sadd.s32 %s191, 1
    %p195 = scmp.eq.s32.totalorder %s17, 1
    %p196 = scmp.ne.s32.totalorder %s191, %s193
    %p197 = scmp.eq.s32.totalorder %s17, 0
    %p198 = por %p196, %p197
    %p199 = scmp.ne.s32.totalorder %s191, %s193
    %p200 = scmp.eq.s32.totalorder %s22, 1
    %p201 = por %p199, %p200
    %p202 = scmp.ne.s32.totalorder %s193, %s194
    %p203 = scmp.eq.s32.totalorder %s22, 0
    %p204 = por %p202, %p203
    %p205 = scmp.ne.s32.totalorder %s193, %s194
    %p206 = scmp.eq.s32.totalorder %s23, 1
    %p207 = por %p205, %p206
    %p209 = scmp.ne.s32.totalorder %s194, %s208
    %p210 = scmp.eq.s32.totalorder %s23, 0
    %p211 = por %p209, %p210
    %s213 = sadd.s32 %s212, 1
    %p216 = scmp.eq.s32.totalorder %s17, 1
    %p217 = scmp.ne.s32.totalorder %s212, %s214
    %p218 = scmp.eq.s32.totalorder %s17, 0
    %p219 = por %p217, %p218
    %p220 = scmp.ne.s32.totalorder %s212, %s214
    %p221 = scmp.eq.s32.totalorder %s22, 1
    %p222 = por %p220, %p221
    %p223 = scmp.ne.s32.totalorder %s214, %s215
    %p224 = scmp.eq.s32.totalorder %s22, 0
    %p225 = por %p223, %p224
    %p226 = scmp.ne.s32.totalorder %s214, %s215
    %p227 = scmp.eq.s32.totalorder %s23, 1
    %p228 = por %p226, %p227
    %p230 = scmp.ne.s32.totalorder %s215, %s229
    %p231 = scmp.eq.s32.totalorder %s23, 0
    %p232 = por %p230, %p231
    %s234 = sadd.s32 %s233, 1
    %p237 = scmp.eq.s32.totalorder %s17, 1
    %p238 = scmp.ne.s32.totalorder %s233, %s235
    %p239 = scmp.eq.s32.totalorder %s17, 0
    %p240 = por %p238, %p239
    %p241 = scmp.ne.s32.totalorder %s233, %s235
    %p242 = scmp.eq.s32.totalorder %s22, 1
    %p243 = por %p241, %p242
    %p244 = scmp.ne.s32.totalorder %s235, %s236
    %p245 = scmp.eq.s32.totalorder %s22, 0
    %p246 = por %p244, %p245
    %p247 = scmp.ne.s32.totalorder %s235, %s236
    %p248 = scmp.eq.s32.totalorder %s23, 1
    %p249 = por %p247, %p248
    %p251 = scmp.ne.s32.totalorder %s236, %s250
    %p252 = scmp.eq.s32.totalorder %s23, 0
    %p253 = por %p251, %p252
    %s255 = sadd.s32 %s254, 1
    %p258 = scmp.eq.s32.totalorder %s17, 1
    %p259 = scmp.ne.s32.totalorder %s254, %s256
    %p260 = scmp.eq.s32.totalorder %s17, 0
    %p261 = por %p259, %p260
    %p262 = scmp.ne.s32.totalorder %s254, %s256
    %p263 = scmp.eq.s32.totalorder %s22, 1
    %p264 = por %p262, %p263
    %p265 = scmp.ne.s32.totalorder %s256, %s257
    %p266 = scmp.eq.s32.totalorder %s22, 0
    %p267 = por %p265, %p266
    %p268 = scmp.ne.s32.totalorder %s256, %s257
    %p269 = scmp.eq.s32.totalorder %s23, 1
    %p270 = por %p268, %p269
    %p272 = scmp.ne.s32.totalorder %s257, %s271
    %p273 = scmp.eq.s32.totalorder %s23, 0
    %p274 = por %p272, %p273
    %s275 = ssub.s32 %s24, %s36
    %s276 = ssub.s32 %s25, %s32
    %s277 = sor.u32 %s275, %s276
    %p278 = scmp.eq.s32.totalorder %s277, 0
    %s280 = sadd.s32 %s279, 1
    %s281 = scalar_select %p278, %s279, %s280
    %p284 = pneg %p278
    %p285 = scmp.eq.s32.totalorder %s17, 1
    %p286 = por %p284, %p285
    %p287 = scmp.ne.s32.totalorder %s279, %s282
    %p288 = scmp.eq.s32.totalorder %s17, 0
    %p289 = por %p287, %p288
    %p290 = scmp.ne.s32.totalorder %s279, %s282
    %p291 = scmp.eq.s32.totalorder %s22, 1
    %p292 = por %p290, %p291
    %p293 = scmp.ne.s32.totalorder %s282, %s283
    %p294 = scmp.eq.s32.totalorder %s22, 0
    %p295 = por %p293, %p294
    %p296 = scmp.ne.s32.totalorder %s282, %s283
    %p297 = scmp.eq.s32.totalorder %s23, 1
    %p298 = por %p296, %p297
    %p300 = scmp.ne.s32.totalorder %s283, %s299
    %p301 = scmp.eq.s32.totalorder %s23, 0
    %p302 = por %p300, %p301
    %p303 = scmp.le.s32.totalorder 1, %s17
    %p304 = scmp.lt.s32.totalorder %s17, 3
    %p305 = pnand %p303, %p304
    %p306 = pneg %p305
    // Predicated region
    $region9: #{_lambda_.1} parent=5 // pred_check
      _
    $region10: #{_lambda_.1} parent=5 // pred_check_branch
      %308 = sbr.rel (%p305) target = $region12
    $region11: #{_lambda_.1} parent=5 // pred_region
      %s309 = ssub.s32 %s17, 1
      // Predicated region
      $region13: #{_lambda_.1} parent=11 // pred_check
        %p310 = pneg %p78
      $region14: #{_lambda_.1} parent=11 // pred_check_branch
        %312 = sbr.rel (%p310) target = $region16
      $region15: #{_lambda_.1} parent=11 // pred_region
        _
      $region16: #{_lambda_.1} parent=11 // pred_fallthru
        _
      // Predicated region
      $region17: #{_lambda_.1} parent=11 // pred_check
        %p313 = pneg %p99
      $region18: #{_lambda_.1} parent=11 // pred_check_branch
        %315 = sbr.rel (%p313) target = $region20
      $region19: #{_lambda_.1} parent=11 // pred_region
        _
      $region20: #{_lambda_.1} parent=11 // pred_fallthru
        _
      // Predicated region
      $region21: #{_lambda_.1} parent=11 // pred_check
        %p316 = pneg %p120
      $region22: #{_lambda_.1} parent=11 // pred_check_branch
        %318 = sbr.rel (%p316) target = $region24
      $region23: #{_lambda_.1} parent=11 // pred_region
        _
      $region24: #{_lambda_.1} parent=11 // pred_fallthru
        _
      // Predicated region
      $region25: #{_lambda_.1} parent=11 // pred_check
        %p319 = pneg %p141
      $region26: #{_lambda_.1} parent=11 // pred_check_branch
        %321 = sbr.rel (%p319) target = $region28
      $region27: #{_lambda_.1} parent=11 // pred_region
        _
      $region28: #{_lambda_.1} parent=11 // pred_fallthru
        _
      // Predicated region
      $region29: #{_lambda_.1} parent=11 // pred_check
        %p322 = pneg %p162
      $region30: #{_lambda_.1} parent=11 // pred_check_branch
        %324 = sbr.rel (%p322) target = $region32
      $region31: #{_lambda_.1} parent=11 // pred_region
        _
      $region32: #{_lambda_.1} parent=11 // pred_fallthru
        _
      // Predicated region
      $region33: #{_lambda_.1} parent=11 // pred_check
        %p325 = pneg %p183
      $region34: #{_lambda_.1} parent=11 // pred_check_branch
        %327 = sbr.rel (%p325) target = $region36
      $region35: #{_lambda_.1} parent=11 // pred_region
        _
      $region36: #{_lambda_.1} parent=11 // pred_fallthru
        _
      // Predicated region
      $region37: #{_lambda_.1} parent=11 // pred_check
        %p328 = pneg %p204
      $region38: #{_lambda_.1} parent=11 // pred_check_branch
        %330 = sbr.rel (%p328) target = $region40
      $region39: #{_lambda_.1} parent=11 // pred_region
        _
      $region40: #{_lambda_.1} parent=11 // pred_fallthru
        _
      // Predicated region
      $region41: #{_lambda_.1} parent=11 // pred_check
        %p331 = pneg %p225
      $region42: #{_lambda_.1} parent=11 // pred_check_branch
        %333 = sbr.rel (%p331) target = $region44
      $region43: #{_lambda_.1} parent=11 // pred_region
        _
      $region44: #{_lambda_.1} parent=11 // pred_fallthru
        _
      // Predicated region
      $region45: #{_lambda_.1} parent=11 // pred_check
        %p334 = pneg %p246
      $region46: #{_lambda_.1} parent=11 // pred_check_branch
        %336 = sbr.rel (%p334) target = $region48
      $region47: #{_lambda_.1} parent=11 // pred_region
        _
      $region48: #{_lambda_.1} parent=11 // pred_fallthru
        _
      // Predicated region
      $region49: #{_lambda_.1} parent=11 // pred_check
        %p337 = pneg %p267
      $region50: #{_lambda_.1} parent=11 // pred_check_branch
        %339 = sbr.rel (%p337) target = $region52
      $region51: #{_lambda_.1} parent=11 // pred_region
        _
      $region52: #{_lambda_.1} parent=11 // pred_fallthru
        _
    $region12: #{_lambda_.1} parent=5 // pred_fallthru
      _
    %p340 = scmp.lt.s32.totalorder %s17, 2
    // Predicated region
    $region53: #{_lambda_.1} parent=5 // pred_check
      %p341 = pneg %p340
    $region54: #{_lambda_.1} parent=5 // pred_check_branch
      %343 = sbr.rel (%p341) target = $region56
    $region55: #{_lambda_.1} parent=5 // pred_region
      // Predicated region
      $region57: #{_lambda_.1} parent=55 // pred_check
        %p344 = pneg %p51
      $region58: #{_lambda_.1} parent=55 // pred_check_branch
        %346 = sbr.rel (%p344) target = $region60
      $region59: #{_lambda_.1} parent=55 // pred_region
        %s347 = smul.u32 2, %s25
        %p348 = scmp.lt.s32.totalorder %s24, 1
        %s349 = scalar_select %p348, %s24, 1
        %p350 = scmp.lt.s32.totalorder %s347, 1
        %s351 = scalar_select %p350, %s347, 1
        %s352 = smul.addr %s349, 2
        %s353 = sadd.s32 %s351, %s352
        %s354 = smul.addr %s353, 4
        %s355 = scalar_lea.vmem %s0, %s354
        %s356 = smul.u32 2, %s25
      $region60: #{_lambda_.1} parent=55 // pred_fallthru
        _
    $region56: #{_lambda_.1} parent=5 // pred_fallthru
      _
    %p357 = scmp.le.s32.totalorder 1, %s17
    %p358 = scmp.lt.s32.totalorder %s17, 3
    %p359 = pnand %p357, %p358
    %p360 = pneg %p359
    // Predicated region
    $region61: #{_lambda_.1} parent=5 // pred_check
      _
    $region62: #{_lambda_.1} parent=5 // pred_check_branch
      %362 = sbr.rel (%p359) target = $region64
    $region63: #{_lambda_.1} parent=5 // pred_region
      %s363 = ssub.s32 %s17, 1
      %s364 = smul.u32 2, %s27
      %p365 = scmp.lt.s32.totalorder %s26, 1
      %s366 = scalar_select %p365, %s26, 1
      %p367 = scmp.lt.s32.totalorder %s364, 1
      %s368 = scalar_select %p367, %s364, 1
      %s369 = smul.addr %s366, 2
      %s370 = sadd.s32 %s368, %s369
      %s371 = smul.addr %s370, 4
      %s372 = scalar_lea.vmem %s0, %s371
      %p373 = pneg %p57
      %p374 = pneg %p54
      %p375 = pneg %p78
      %p376 = pneg %p75
      %p377 = pneg %p99
      %p378 = pneg %p96
      %p379 = pneg %p120
      %p380 = pneg %p117
      %p381 = pneg %p141
      %p382 = pneg %p138
      %p383 = pneg %p162
      %p384 = pneg %p159
      %p385 = pneg %p183
      %p386 = pneg %p180
      %p387 = pneg %p204
      %p388 = pneg %p201
      %p389 = pneg %p225
      %p390 = pneg %p222
      %p391 = pneg %p246
      %p392 = pneg %p243
      %p393 = pneg %p267
      %p394 = pneg %p264
      %p395 = pneg %p295
      %p396 = pneg %p292
      %s397 = smul.u32 2, %s27
      %p398 = scmp.lt.s32.totalorder %s26, 1
      %s399 = scalar_select %p398, %s26, 1
      %p400 = scmp.lt.s32.totalorder %s397, 1
      %s401 = scalar_select %p400, %s397, 1
      %s402 = smul.addr %s399, 2
      %s403 = sadd.s32 %s401, %s402
      %s404 = smul.addr %s403, 4
      %s405 = scalar_lea.vmem %s11, %s404
      %s406 = smul.u32 2, %s27
      %p407 = scmp.lt.s32.totalorder %s26, 1
      %s408 = scalar_select %p407, %s26, 1
      %p409 = scmp.lt.s32.totalorder %s406, 1
      %s410 = scalar_select %p409, %s406, 1
      %s411 = smul.addr %s408, 2
      %s412 = sadd.s32 %s410, %s411
      %s413 = smul.addr %s412, 4
      %s414 = scalar_lea.vmem %s0, %s413
      %s415 = smul.u32 2, %s27
      %s416 = smul.u32 2, %s27
      %p417 = scmp.lt.s32.totalorder %s26, 1
      %s418 = scalar_select %p417, %s26, 1
      %p419 = scmp.lt.s32.totalorder %s416, 1
      %s420 = scalar_select %p419, %s416, 1
      %s421 = smul.addr %s418, 2
      %s422 = sadd.s32 %s420, %s421
      %s423 = smul.addr %s422, 4
      %s424 = scalar_lea.vmem %s11, %s423
      %s425 = smul.u32 2, %s27
      %v427 = vld [vmem:[%s414] sm:$0xff]
      %v428 = vld [vmem:[%s1] sm:$0xf]
      %v429 = vld [vmem:[%s1 + $0x4] sm:$0xf]
      %v430 = vld [vmem:[%s1 + $0x8] sm:$0xf]
      %v431 = vld [vmem:[%s1 + $0xc] sm:$0xf]
      %v432 = vld [vmem:[%s1 + $0x10] sm:$0xf]
      %v433 = vld [vmem:[%s1 + $0x14] sm:$0xf]
      %v434 = vld [vmem:[%s1 + $0x18] sm:$0xf]
      %v435 = vld [vmem:[%s1 + $0x1c] sm:$0xf]
      %v437 = vcombine.high %v427, %v427
      %v439 = vpack.c.bf16 %v427, %v427
      %v440 = vpack.c.bf16 %v437, %v437
      %v441 = vld [vmem:[%s2] sm:$0xff]
      %v442 = vld [vmem:[%s2 + $0x8] sm:$0xff]
      %v443 = vld [vmem:[%s2 + $0x10] sm:$0xff]
      %v444 = vld [vmem:[%s2 + $0x18] sm:$0xff]
      %v445 = vld [vmem:[%s2 + $0x20] sm:$0xff]
      %v446 = vld [vmem:[%s2 + $0x28] sm:$0xff]
      %v447 = vld [vmem:[%s2 + $0x30] sm:$0xff]
      %v448 = vld [vmem:[%s2 + $0x38] sm:$0xff]
      %450 = vset.pattern.permute.xlu0 0
      %451 = vperm.xlu0 %450, %v441
      %v452 = vpop.permute.xlu0 %451
      %455 = vset.pattern.permute.xlu0 0
      %456 = vperm.xlu0 %455, %v442
      %v457 = vpop.permute.xlu0 %456
      %460 = vset.pattern.permute.xlu0 0
      %461 = vperm.xlu0 %460, %v443
      %v462 = vpop.permute.xlu0 %461
      %465 = vset.pattern.permute.xlu0 0
      %466 = vperm.xlu0 %465, %v444
      %v467 = vpop.permute.xlu0 %466
      %470 = vset.pattern.permute.xlu0 0
      %471 = vperm.xlu0 %470, %v445
      %v472 = vpop.permute.xlu0 %471
      %475 = vset.pattern.permute.xlu0 0
      %476 = vperm.xlu0 %475, %v446
      %v477 = vpop.permute.xlu0 %476
      %480 = vset.pattern.permute.xlu0 0
      %481 = vperm.xlu0 %480, %v447
      %v482 = vpop.permute.xlu0 %481
      %485 = vset.pattern.permute.xlu0 0
      %486 = vperm.xlu0 %485, %v448
      %v487 = vpop.permute.xlu0 %486
      %v497 = vunpack.c.l.b16 %v428
      %v498 = vunpack.c.l.b16 %v429
      %v499 = vunpack.c.l.b16 %v430
      %v500 = vunpack.c.l.b16 %v431
      %v501 = vunpack.c.l.b16 %v432
      %v502 = vunpack.c.l.b16 %v433
      %v503 = vunpack.c.l.b16 %v434
      %v504 = vunpack.c.l.b16 %v435
      %v505 = vpack.c.b16 %v498, %v497
      %v506 = vpack.c.b16 %v500, %v499
      %v507 = vpack.c.b16 %v502, %v501
      %v508 = vpack.c.b16 %v504, %v503
      %vm509 = vcmask 31744
      %v511 = vsel %vm509, %v505, 0
      %v514 = vsel %vm509, %v506, 0
      %v517 = vsel %vm509, %v507, 0
      %v520 = vsel %vm509, %v508, 0
      %vm522 = vcmask 1041408
      %v524 = vsel %vm522, %v439, 0
      %v527 = vsel %vm522, %v440, 0
      %529 = vmatprep.subr.bf16.mxu0 %v527
      %530 = vmatpush1.bf16.msra.mxu0 %v524
      %531 = vmatprep.subr.bf16.mxu0 0
      %532 = vmatpush1.bf16.msra.mxu0 0
      %533 = vmatprep.subr.bf16.mxu0 0
      %534 = vmatpush1.bf16.msra.mxu0 0
      %535 = vmatprep.subr.bf16.mxu0 0
      %536 = vmatpush1.bf16.msra.mxu0 0
      %537 = vmatprep.subr.bf16.mxu0 0
      %538 = vmatpush1.bf16.msra.mxu0 0
      %539 = vmatprep.subr.bf16.mxu0 0
      %540 = vmatpush1.bf16.msra.mxu0 0
      %541 = vmatprep.subr.bf16.mxu0 0
      %542 = vmatpush1.bf16.msra.mxu0 0
      %543 = vmatprep.subr.bf16.mxu0 0
      %544 = vmatpush1.bf16.msra.mxu0 0
      %545 = vmatprep.subr.bf16.mxu0 0
      %546 = vmatpush1.bf16.msra.mxu0 0
      %547 = vmatprep.subr.bf16.mxu0 0
      %548 = vmatpush1.bf16.msra.mxu0 0
      %549 = vmatprep.subr.bf16.mxu0 0
      %550 = vmatpush1.bf16.msra.mxu0 0
      %551 = vmatprep.subr.bf16.mxu0 0
      %552 = vmatpush1.bf16.msra.mxu0 0
      %553 = vmatprep.subr.bf16.mxu0 0
      %554 = vmatpush1.bf16.msra.mxu0 0
      %555 = vmatprep.subr.bf16.mxu0 0
      %556 = vmatpush1.bf16.msra.mxu0 0
      %557 = vmatprep.subr.bf16.mxu0 0
      %558 = vmatpush1.bf16.msra.mxu0 0
      %559 = vmatprep.subr.bf16.mxu0 0
      %560 = vmatpush1.bf16.msra.mxu0 0
      %561 = vmatprep.mubr.bf16.mxu0 0
      %562 = vmatmul.mubr.bf16.gmra.mrb[0].mxu0 %v511
      %v563 = vpop.f32.mrb[0].mxu0
      %v564 = vadd.f32 %v452, %v563
      %v565 = vpop.f32.mrb[0].mxu0
      %v566 = vadd.f32 %v452, %v565
      %v567 = vpop.f32.mrb[0].mxu0
      %v568 = vadd.f32 %v457, %v567
      %v569 = vpop.f32.mrb[0].mxu0
      %v570 = vadd.f32 %v457, %v569
      %571 = vmatprep.mubr.bf16.mxu0 0
      %572 = vmatmul.mubr.bf16.gmra.mrb[0].mxu0 %v514
      %v573 = vpop.f32.mrb[0].mxu0
      %v574 = vadd.f32 %v462, %v573
      %v575 = vpop.f32.mrb[0].mxu0
      %v576 = vadd.f32 %v462, %v575
      %v577 = vpop.f32.mrb[0].mxu0
      %v578 = vadd.f32 %v467, %v577
      %v579 = vpop.f32.mrb[0].mxu0
      %v580 = vadd.f32 %v467, %v579
      %581 = vmatprep.mubr.bf16.mxu0 0
      %582 = vmatmul.mubr.bf16.gmra.mrb[0].mxu0 %v517
      %v583 = vpop.f32.mrb[0].mxu0
      %v584 = vadd.f32 %v472, %v583
      %v585 = vpop.f32.mrb[0].mxu0
      %v586 = vadd.f32 %v472, %v585
      %v587 = vpop.f32.mrb[0].mxu0
      %v588 = vadd.f32 %v477, %v587
      %v589 = vpop.f32.mrb[0].mxu0
      %v590 = vadd.f32 %v477, %v589
      %591 = vmatprep.mubr.bf16.mxu0 0
      %592 = vmatmul.mubr.bf16.gmra.mrb[0].mxu0 %v520
      %v593 = vpop.f32.mrb[0].mxu0
      %v594 = vadd.f32 %v482, %v593
      %v595 = vpop.f32.mrb[0].mxu0
      %v596 = vadd.f32 %v482, %v595
      %v597 = vpop.f32.mrb[0].mxu0
      %v598 = vadd.f32 %v487, %v597
      %v599 = vpop.f32.mrb[0].mxu0
      %v600 = vadd.f32 %v487, %v599
      %601 = vdwg.mxu0
      %v602 = vmax.f32 %v564, 0.0
      %v603 = vmax.f32 %v566, 0.0
      %v604 = vmax.f32 %v568, 0.0
      %v605 = vmax.f32 %v570, 0.0
      %v606 = vmax.f32 %v574, 0.0
      %v607 = vmax.f32 %v576, 0.0
      %v608 = vmax.f32 %v578, 0.0
      %v609 = vmax.f32 %v580, 0.0
      %v610 = vmax.f32 %v584, 0.0
      %v611 = vmax.f32 %v586, 0.0
      %v612 = vmax.f32 %v588, 0.0
      %v613 = vmax.f32 %v590, 0.0
      %v614 = vmax.f32 %v594, 0.0
      %v615 = vmax.f32 %v596, 0.0
      %v616 = vmax.f32 %v598, 0.0
      %v617 = vmax.f32 %v600, 0.0
      %v618 = vld [vmem:[%s3] sm:$0xf]
      %v619 = vld [vmem:[%s3 + $0x4] sm:$0xf]
      %v620 = vld [vmem:[%s3 + $0x8] sm:$0xf]
      %v621 = vld [vmem:[%s3 + $0xc] sm:$0xf]
      %v622 = vld [vmem:[%s3 + $0x10] sm:$0xf]
      %v623 = vld [vmem:[%s3 + $0x14] sm:$0xf]
      %v624 = vld [vmem:[%s3 + $0x18] sm:$0xf]
      %v625 = vld [vmem:[%s3 + $0x1c] sm:$0xf]
      %v626 = vpack.c.bf16 %v604, %v602
      %v627 = vpack.c.bf16 %v605, %v603
      %v628 = vpack.c.bf16 %v608, %v606
      %v629 = vpack.c.bf16 %v609, %v607
      %v630 = vpack.c.bf16 %v612, %v610
      %v631 = vpack.c.bf16 %v613, %v611
      %v632 = vpack.c.bf16 %v616, %v614
      %v633 = vpack.c.bf16 %v617, %v615
      %v634 = vld [vmem:[%s4] sm:$0xff]
      %v635 = vld [vmem:[%s4 + $0x8] sm:$0xff]
      %v636 = vld [vmem:[%s4 + $0x10] sm:$0xff]
      %v637 = vld [vmem:[%s4 + $0x18] sm:$0xff]
      %v638 = vld [vmem:[%s4 + $0x20] sm:$0xff]
      %v639 = vld [vmem:[%s4 + $0x28] sm:$0xff]
      %v640 = vld [vmem:[%s4 + $0x30] sm:$0xff]
      %v641 = vld [vmem:[%s4 + $0x38] sm:$0xff]
      %643 = vset.pattern.permute.xlu0 0
      %644 = vperm.xlu0 %643, %v634
      %v645 = vpop.permute.xlu0 %644
      %648 = vset.pattern.permute.xlu0 0
      %649 = vperm.xlu0 %648, %v635
      %v650 = vpop.permute.xlu0 %649
      %653 = vset.pattern.permute.xlu0 0
      %654 = vperm.xlu0 %653, %v636
      %v655 = vpop.permute.xlu0 %654
      %658 = vset.pattern.permute.xlu0 0
      %659 = vperm.xlu0 %658, %v637
      %v660 = vpop.permute.xlu0 %659
      %663 = vset.pattern.permute.xlu0 0
      %664 = vperm.xlu0 %663, %v638
      %v665 = vpop.permute.xlu0 %664
      %668 = vset.pattern.permute.xlu0 0
      %669 = vperm.xlu0 %668, %v639
      %v670 = vpop.permute.xlu0 %669
      %673 = vset.pattern.permute.xlu0 0
      %674 = vperm.xlu0 %673, %v640
      %v675 = vpop.permute.xlu0 %674
      %678 = vset.pattern.permute.xlu0 0
      %679 = vperm.xlu0 %678, %v641
      %v680 = vpop.permute.xlu0 %679
      %v690 = vunpack.c.l.b16 %v618
      %v691 = vunpack.c.l.b16 %v619
      %v692 = vunpack.c.l.b16 %v620
      %v693 = vunpack.c.l.b16 %v621
      %v694 = vunpack.c.l.b16 %v622
      %v695 = vunpack.c.l.b16 %v623
      %v696 = vunpack.c.l.b16 %v624
      %v697 = vunpack.c.l.b16 %v625
      %v698 = vpack.c.b16 %v691, %v690
      %v699 = vpack.c.b16 %v693, %v692
      %v700 = vpack.c.b16 %v695, %v694
      %v701 = vpack.c.b16 %v697, %v696
      %vm702 = vcmask 523264
      %v704 = vsel %vm702, %v698, 0
      %v707 = vsel %vm702, %v699, 0
      %v710 = vsel %vm702, %v700, 0
      %v713 = vsel %vm702, %v701, 0
      %715 = vmatprep.subr.bf16.mxu0 %v627
      %716 = vmatpush1.bf16.msra.mxu0 %v626
      %717 = vmatprep.subr.bf16.mxu0 %v629
      %718 = vmatpush1.bf16.msra.mxu0 %v628
      %719 = vmatprep.subr.bf16.mxu0 %v631
      %720 = vmatpush1.bf16.msra.mxu0 %v630
      %721 = vmatprep.subr.bf16.mxu0 %v633
      %722 = vmatpush1.bf16.msra.mxu0 %v632
      %723 = vmatprep.subr.bf16.mxu0 0
      %724 = vmatpush1.bf16.msra.mxu0 0
      %725 = vmatprep.subr.bf16.mxu0 0
      %726 = vmatpush1.bf16.msra.mxu0 0
      %727 = vmatprep.subr.bf16.mxu0 0
      %728 = vmatpush1.bf16.msra.mxu0 0
      %729 = vmatprep.subr.bf16.mxu0 0
      %730 = vmatpush1.bf16.msra.mxu0 0
      %731 = vmatprep.subr.bf16.mxu0 0
      %732 = vmatpush1.bf16.msra.mxu0 0
      %733 = vmatprep.subr.bf16.mxu0 0
      %734 = vmatpush1.bf16.msra.mxu0 0
      %735 = vmatprep.subr.bf16.mxu0 0
      %736 = vmatpush1.bf16.msra.mxu0 0
      %737 = vmatprep.subr.bf16.mxu0 0
      %738 = vmatpush1.bf16.msra.mxu0 0
      %739 = vmatprep.subr.bf16.mxu0 0
      %740 = vmatpush1.bf16.msra.mxu0 0
      %741 = vmatprep.subr.bf16.mxu0 0
      %742 = vmatpush1.bf16.msra.mxu0 0
      %743 = vmatprep.subr.bf16.mxu0 0
      %744 = vmatpush1.bf16.msra.mxu0 0
      %745 = vmatprep.subr.bf16.mxu0 0
      %746 = vmatpush1.bf16.msra.mxu0 0
      %747 = vmatprep.mubr.bf16.mxu0 0
      %748 = vmatmul.mubr.bf16.gmra.mrb[0].mxu0 %v704
      %v749 = vpop.f32.mrb[0].mxu0
      %v750 = vadd.f32 %v645, %v749
      %v751 = vpop.f32.mrb[0].mxu0
      %v752 = vadd.f32 %v645, %v751
      %v753 = vpop.f32.mrb[0].mxu0
      %v754 = vadd.f32 %v650, %v753
      %v755 = vpop.f32.mrb[0].mxu0
      %v756 = vadd.f32 %v650, %v755
      %757 = vmatprep.mubr.bf16.mxu0 0
      %758 = vmatmul.mubr.bf16.gmra.mrb[0].mxu0 %v707
      %v759 = vpop.f32.mrb[0].mxu0
      %v760 = vadd.f32 %v655, %v759
      %v761 = vpop.f32.mrb[0].mxu0
      %v762 = vadd.f32 %v655, %v761
      %v763 = vpop.f32.mrb[0].mxu0
      %v764 = vadd.f32 %v660, %v763
      %v765 = vpop.f32.mrb[0].mxu0
      %v766 = vadd.f32 %v660, %v765
      %767 = vmatprep.mubr.bf16.mxu0 0
      %768 = vmatmul.mubr.bf16.gmra.mrb[0].mxu0 %v710
      %v769 = vpop.f32.mrb[0].mxu0
      %v770 = vadd.f32 %v665, %v769
      %v771 = vpop.f32.mrb[0].mxu0
      %v772 = vadd.f32 %v665, %v771
      %v773 = vpop.f32.mrb[0].mxu0
      %v774 = vadd.f32 %v670, %v773
      %v775 = vpop.f32.mrb[0].mxu0
      %v776 = vadd.f32 %v670, %v775
      %777 = vmatprep.mubr.bf16.mxu0 0
      %778 = vmatmul.mubr.bf16.gmra.mrb[0].mxu0 %v713
      %v779 = vpop.f32.mrb[0].mxu0
      %v780 = vadd.f32 %v675, %v779
      %v781 = vpop.f32.mrb[0].mxu0
      %v782 = vadd.f32 %v675, %v781
      %v783 = vpop.f32.mrb[0].mxu0
      %v784 = vadd.f32 %v680, %v783
      %v785 = vpop.f32.mrb[0].mxu0
      %v786 = vadd.f32 %v680, %v785
      %787 = vdwg.mxu0
      %v788 = vmax.f32 %v750, 0.0
      %v789 = vmax.f32 %v752, 0.0
      %v790 = vmax.f32 %v754, 0.0
      %v791 = vmax.f32 %v756, 0.0
      %v792 = vmax.f32 %v760, 0.0
      %v793 = vmax.f32 %v762, 0.0
      %v794 = vmax.f32 %v764, 0.0
      %v795 = vmax.f32 %v766, 0.0
      %v796 = vmax.f32 %v770, 0.0
      %v797 = vmax.f32 %v772, 0.0
      %v798 = vmax.f32 %v774, 0.0
      %v799 = vmax.f32 %v776, 0.0
      %v800 = vmax.f32 %v780, 0.0
      %v801 = vmax.f32 %v782, 0.0
      %v802 = vmax.f32 %v784, 0.0
      %v803 = vmax.f32 %v786, 0.0
      %v804 = vld [vmem:[%s5] sm:$0xf]
      %v805 = vld [vmem:[%s5 + $0x4] sm:$0xf]
      %v806 = vld [vmem:[%s5 + $0x8] sm:$0xf]
      %v807 = vld [vmem:[%s5 + $0xc] sm:$0xf]
      %v808 = vld [vmem:[%s5 + $0x10] sm:$0xf]
      %v809 = vld [vmem:[%s5 + $0x14] sm:$0xf]
      %v810 = vld [vmem:[%s5 + $0x18] sm:$0xf]
      %v811 = vld [vmem:[%s5 + $0x1c] sm:$0xf]
      %v812 = vpack.c.bf16 %v790, %v788
      %v813 = vpack.c.bf16 %v791, %v789
      %v814 = vpack.c.bf16 %v794, %v792
      %v815 = vpack.c.bf16 %v795, %v793
      %v816 = vpack.c.bf16 %v798, %v796
      %v817 = vpack.c.bf16 %v799, %v797
      %v818 = vpack.c.bf16 %v802, %v800
      %v819 = vpack.c.bf16 %v803, %v801
      %v820 = vld [vmem:[%s6] sm:$0xff]
      %v821 = vld [vmem:[%s6 + $0x8] sm:$0xff]
      %v822 = vld [vmem:[%s6 + $0x10] sm:$0xff]
      %v823 = vld [vmem:[%s6 + $0x18] sm:$0xff]
      %v824 = vld [vmem:[%s6 + $0x20] sm:$0xff]
      %v825 = vld [vmem:[%s6 + $0x28] sm:$0xff]
      %v826 = vld [vmem:[%s6 + $0x30] sm:$0xff]
      %v827 = vld [vmem:[%s6 + $0x38] sm:$0xff]
      %829 = vset.pattern.permute.xlu0 0
      %830 = vperm.xlu0 %829, %v820
      %v831 = vpop.permute.xlu0 %830
      %834 = vset.pattern.permute.xlu0 0
      %835 = vperm.xlu0 %834, %v821
      %v836 = vpop.permute.xlu0 %835
      %839 = vset.pattern.permute.xlu0 0
      %840 = vperm.xlu0 %839, %v822
      %v841 = vpop.permute.xlu0 %840
      %844 = vset.pattern.permute.xlu0 0
      %845 = vperm.xlu0 %844, %v823
      %v846 = vpop.permute.xlu0 %845
      %849 = vset.pattern.permute.xlu0 0
      %850 = vperm.xlu0 %849, %v824
      %v851 = vpop.permute.xlu0 %850
      %854 = vset.pattern.permute.xlu0 0
      %855 = vperm.xlu0 %854, %v825
      %v856 = vpop.permute.xlu0 %855
      %859 = vset.pattern.permute.xlu0 0
      %860 = vperm.xlu0 %859, %v826
      %v861 = vpop.permute.xlu0 %860
      %864 = vset.pattern.permute.xlu0 0
      %865 = vperm.xlu0 %864, %v827
      %v866 = vpop.permute.xlu0 %865
      %v876 = vunpack.c.l.b16 %v804
      %v877 = vunpack.c.l.b16 %v805
      %v878 = vunpack.c.l.b16 %v806
      %v879 = vunpack.c.l.b16 %v807
      %v880 = vunpack.c.l.b16 %v808
      %v881 = vunpack.c.l.b16 %v809
      %v882 = vunpack.c.l.b16 %v810
      %v883 = vunpack.c.l.b16 %v811
      %v884 = vpack.c.b16 %v877, %v876
      %v885 = vpack.c.b16 %v879, %v878
      %v886 = vpack.c.b16 %v881, %v880
      %v887 = vpack.c.b16 %v883, %v882
      %v889 = vsel %vm702, %v884, 0
      %v892 = vsel %vm702, %v885, 0
      %v895 = vsel %vm702, %v886, 0
      %v898 = vsel %vm702, %v887, 0
      %900 = vmatprep.subr.bf16.mxu0 %v813
      %901 = vmatpush1.bf16.msra.mxu0 %v812
      %902 = vmatprep.subr.bf16.mxu0 %v815
      %903 = vmatpush1.bf16.msra.mxu0 %v814
      %904 = vmatprep.subr.bf16.mxu0 %v817
      %905 = vmatpush1.bf16.msra.mxu0 %v816
      %906 = vmatprep.subr.bf16.mxu0 %v819
      %907 = vmatpush1.bf16.msra.mxu0 %v818
      %908 = vmatprep.subr.bf16.mxu0 0
      %909 = vmatpush1.bf16.msra.mxu0 0
      %910 = vmatprep.subr.bf16.mxu0 0
      %911 = vmatpush1.bf16.msra.mxu0 0
      %912 = vmatprep.subr.bf16.mxu0 0
      %913 = vmatpush1.bf16.msra.mxu0 0
      %914 = vmatprep.subr.bf16.mxu0 0
      %915 = vmatpush1.bf16.msra.mxu0 0
      %916 = vmatprep.subr.bf16.mxu0 0
      %917 = vmatpush1.bf16.msra.mxu0 0
      %918 = vmatprep.subr.bf16.mxu0 0
      %919 = vmatpush1.bf16.msra.mxu0 0
      %920 = vmatprep.subr.bf16.mxu0 0
      %921 = vmatpush1.bf16.msra.mxu0 0
      %922 = vmatprep.subr.bf16.mxu0 0
      %923 = vmatpush1.bf16.msra.mxu0 0
      %924 = vmatprep.subr.bf16.mxu0 0
      %925 = vmatpush1.bf16.msra.mxu0 0
      %926 = vmatprep.subr.bf16.mxu0 0
      %927 = vmatpush1.bf16.msra.mxu0 0
      %928 = vmatprep.subr.bf16.mxu0 0
      %929 = vmatpush1.bf16.msra.mxu0 0
      %930 = vmatprep.subr.bf16.mxu0 0
      %931 = vmatpush1.bf16.msra.mxu0 0
      %932 = vmatprep.mubr.bf16.mxu0 0
      %933 = vmatmul.mubr.bf16.gmra.mrb[0].mxu0 %v889
      %v934 = vpop.f32.mrb[0].mxu0
      %v935 = vadd.f32 %v831, %v934
      %v936 = vpop.f32.mrb[0].mxu0
      %v937 = vadd.f32 %v831, %v936
      %v938 = vpop.f32.mrb[0].mxu0
      %v939 = vadd.f32 %v836, %v938
      %v940 = vpop.f32.mrb[0].mxu0
      %v941 = vadd.f32 %v836, %v940
      %942 = vmatprep.mubr.bf16.mxu0 0
      %943 = vmatmul.mubr.bf16.gmra.mrb[0].mxu0 %v892
      %v944 = vpop.f32.mrb[0].mxu0
      %v945 = vadd.f32 %v841, %v944
      %v946 = vpop.f32.mrb[0].mxu0
      %v947 = vadd.f32 %v841, %v946
      %v948 = vpop.f32.mrb[0].mxu0
      %v949 = vadd.f32 %v846, %v948
      %v950 = vpop.f32.mrb[0].mxu0
      %v951 = vadd.f32 %v846, %v950
      %952 = vmatprep.mubr.bf16.mxu0 0
      %953 = vmatmul.mubr.bf16.gmra.mrb[0].mxu0 %v895
      %v954 = vpop.f32.mrb[0].mxu0
      %v955 = vadd.f32 %v851, %v954
      %v956 = vpop.f32.mrb[0].mxu0
      %v957 = vadd.f32 %v851, %v956
      %v958 = vpop.f32.mrb[0].mxu0
      %v959 = vadd.f32 %v856, %v958
      %v960 = vpop.f32.mrb[0].mxu0
      %v961 = vadd.f32 %v856, %v960
      %962 = vmatprep.mubr.bf16.mxu0 0
      %963 = vmatmul.mubr.bf16.gmra.mrb[0].mxu0 %v898
      %v964 = vpop.f32.mrb[0].mxu0
      %v965 = vadd.f32 %v861, %v964
      %v966 = vpop.f32.mrb[0].mxu0
      %v967 = vadd.f32 %v861, %v966
      %v968 = vpop.f32.mrb[0].mxu0
      %v969 = vadd.f32 %v866, %v968
      %v970 = vpop.f32.mrb[0].mxu0
      %v971 = vadd.f32 %v866, %v970
      %972 = vdwg.mxu0
      %v973 = vmax.f32 %v935, 0.0
      %v974 = vmax.f32 %v937, 0.0
      %v975 = vmax.f32 %v939, 0.0
      %v976 = vmax.f32 %v941, 0.0
      %v977 = vmax.f32 %v945, 0.0
      %v978 = vmax.f32 %v947, 0.0
      %v979 = vmax.f32 %v949, 0.0
      %v980 = vmax.f32 %v951, 0.0
      %v981 = vmax.f32 %v955, 0.0
      %v982 = vmax.f32 %v957, 0.0
      %v983 = vmax.f32 %v959, 0.0
      %v984 = vmax.f32 %v961, 0.0
      %v985 = vmax.f32 %v965, 0.0
      %v986 = vmax.f32 %v967, 0.0
      %v987 = vmax.f32 %v969, 0.0
      %v988 = vmax.f32 %v971, 0.0
      %v989 = vld [vmem:[%s7] sm:$0xf]
      %v990 = vld [vmem:[%s7 + $0x4] sm:$0xf]
      %v991 = vld [vmem:[%s7 + $0x8] sm:$0xf]
      %v992 = vld [vmem:[%s7 + $0xc] sm:$0xf]
      %v993 = vld [vmem:[%s7 + $0x10] sm:$0xf]
      %v994 = vld [vmem:[%s7 + $0x14] sm:$0xf]
      %v995 = vld [vmem:[%s7 + $0x18] sm:$0xf]
      %v996 = vld [vmem:[%s7 + $0x1c] sm:$0xf]
      %v997 = vpack.c.bf16 %v975, %v973
      %v998 = vpack.c.bf16 %v976, %v974
      %v999 = vpack.c.bf16 %v979, %v977
      %v1000 = vpack.c.bf16 %v980, %v978
      %v1001 = vpack.c.bf16 %v983, %v981
      %v1002 = vpack.c.bf16 %v984, %v982
      %v1003 = vpack.c.bf16 %v987, %v985
      %v1004 = vpack.c.bf16 %v988, %v986
      %v1005 = vld [vmem:[%s8] sm:$0xff]
      %v1006 = vld [vmem:[%s8 + $0x8] sm:$0xff]
      %v1007 = vld [vmem:[%s8 + $0x10] sm:$0xff]
      %v1008 = vld [vmem:[%s8 + $0x18] sm:$0xff]
      %v1009 = vld [vmem:[%s8 + $0x20] sm:$0xff]
      %v1010 = vld [vmem:[%s8 + $0x28] sm:$0xff]
      %v1011 = vld [vmem:[%s8 + $0x30] sm:$0xff]
      %v1012 = vld [vmem:[%s8 + $0x38] sm:$0xff]
      %1014 = vset.pattern.permute.xlu0 0
      %1015 = vperm.xlu0 %1014, %v1005
      %v1016 = vpop.permute.xlu0 %1015
      %1019 = vset.pattern.permute.xlu0 0
      %1020 = vperm.xlu0 %1019, %v1006
      %v1021 = vpop.permute.xlu0 %1020
      %1024 = vset.pattern.permute.xlu0 0
      %1025 = vperm.xlu0 %1024, %v1007
      %v1026 = vpop.permute.xlu0 %1025
      %1029 = vset.pattern.permute.xlu0 0
      %1030 = vperm.xlu0 %1029, %v1008
      %v1031 = vpop.permute.xlu0 %1030
      %1034 = vset.pattern.permute.xlu0 0
      %1035 = vperm.xlu0 %1034, %v1009
      %v1036 = vpop.permute.xlu0 %1035
      %1039 = vset.pattern.permute.xlu0 0
      %1040 = vperm.xlu0 %1039, %v1010
      %v1041 = vpop.permute.xlu0 %1040
      %1044 = vset.pattern.permute.xlu0 0
      %1045 = vperm.xlu0 %1044, %v1011
      %v1046 = vpop.permute.xlu0 %1045
      %1049 = vset.pattern.permute.xlu0 0
      %1050 = vperm.xlu0 %1049, %v1012
      %v1051 = vpop.permute.xlu0 %1050
      %v1061 = vunpack.c.l.b16 %v989
      %v1062 = vunpack.c.l.b16 %v990
      %v1063 = vunpack.c.l.b16 %v991
      %v1064 = vunpack.c.l.b16 %v992
      %v1065 = vunpack.c.l.b16 %v993
      %v1066 = vunpack.c.l.b16 %v994
      %v1067 = vunpack.c.l.b16 %v995
      %v1068 = vunpack.c.l.b16 %v996
      %v1069 = vpack.c.b16 %v1062, %v1061
      %v1070 = vpack.c.b16 %v1064, %v1063
      %v1071 = vpack.c.b16 %v1066, %v1065
      %v1072 = vpack.c.b16 %v1068, %v1067
      %v1074 = vsel %vm702, %v1069, 0
      %v1077 = vsel %vm702, %v1070, 0
      %v1080 = vsel %vm702, %v1071, 0
      %v1083 = vsel %vm702, %v1072, 0
      %1085 = vmatprep.subr.bf16.mxu0 %v998
      %1086 = vmatpush1.bf16.msra.mxu0 %v997
      %1087 = vmatprep.subr.bf16.mxu0 %v1000
      %1088 = vmatpush1.bf16.msra.mxu0 %v999
      %1089 = vmatprep.subr.bf16.mxu0 %v1002
      %1090 = vmatpush1.bf16.msra.mxu0 %v1001
      %1091 = vmatprep.subr.bf16.mxu0 %v1004
      %1092 = vmatpush1.bf16.msra.mxu0 %v1003
      %1093 = vmatprep.subr.bf16.mxu0 0
      %1094 = vmatpush1.bf16.msra.mxu0 0
      %1095 = vmatprep.subr.bf16.mxu0 0
      %1096 = vmatpush1.bf16.msra.mxu0 0
      %1097 = vmatprep.subr.bf16.mxu0 0
      %1098 = vmatpush1.bf16.msra.mxu0 0
      %1099 = vmatprep.subr.bf16.mxu0 0
      %1100 = vmatpush1.bf16.msra.mxu0 0
      %1101 = vmatprep.subr.bf16.mxu0 0
      %1102 = vmatpush1.bf16.msra.mxu0 0
      %1103 = vmatprep.subr.bf16.mxu0 0
      %1104 = vmatpush1.bf16.msra.mxu0 0
      %1105 = vmatprep.subr.bf16.mxu0 0
      %1106 = vmatpush1.bf16.msra.mxu0 0
      %1107 = vmatprep.subr.bf16.mxu0 0
      %1108 = vmatpush1.bf16.msra.mxu0 0
      %1109 = vmatprep.subr.bf16.mxu0 0
      %1110 = vmatpush1.bf16.msra.mxu0 0
      %1111 = vmatprep.subr.bf16.mxu0 0
      %1112 = vmatpush1.bf16.msra.mxu0 0
      %1113 = vmatprep.subr.bf16.mxu0 0
      %1114 = vmatpush1.bf16.msra.mxu0 0
      %1115 = vmatprep.subr.bf16.mxu0 0
      %1116 = vmatpush1.bf16.msra.mxu0 0
      %1117 = vmatprep.mubr.bf16.mxu0 0
      %1118 = vmatmul.mubr.bf16.gmra.mrb[0].mxu0 %v1074
      %v1119 = vpop.f32.mrb[0].mxu0
      %v1120 = vadd.f32 %v1016, %v1119
      %v1121 = vpop.f32.mrb[0].mxu0
      %v1122 = vadd.f32 %v1016, %v1121
      %v1123 = vpop.f32.mrb[0].mxu0
      %v1124 = vadd.f32 %v1021, %v1123
      %v1125 = vpop.f32.mrb[0].mxu0
      %v1126 = vadd.f32 %v1021, %v1125
      %1127 = vmatprep.mubr.bf16.mxu0 0
      %1128 = vmatmul.mubr.bf16.gmra.mrb[0].mxu0 %v1077
      %v1129 = vpop.f32.mrb[0].mxu0
      %v1130 = vadd.f32 %v1026, %v1129
      %v1131 = vpop.f32.mrb[0].mxu0
      %v1132 = vadd.f32 %v1026, %v1131
      %v1133 = vpop.f32.mrb[0].mxu0
      %v1134 = vadd.f32 %v1031, %v1133
      %v1135 = vpop.f32.mrb[0].mxu0
      %v1136 = vadd.f32 %v1031, %v1135
      %1137 = vmatprep.mubr.bf16.mxu0 0
      %1138 = vmatmul.mubr.bf16.gmra.mrb[0].mxu0 %v1080
      %v1139 = vpop.f32.mrb[0].mxu0
      %v1140 = vadd.f32 %v1036, %v1139
      %v1141 = vpop.f32.mrb[0].mxu0
      %v1142 = vadd.f32 %v1036, %v1141
      %v1143 = vpop.f32.mrb[0].mxu0
      %v1144 = vadd.f32 %v1041, %v1143
      %v1145 = vpop.f32.mrb[0].mxu0
      %v1146 = vadd.f32 %v1041, %v1145
      %1147 = vmatprep.mubr.bf16.mxu0 0
      %1148 = vmatmul.mubr.bf16.gmra.mrb[0].mxu0 %v1083
      %v1149 = vpop.f32.mrb[0].mxu0
      %v1150 = vadd.f32 %v1046, %v1149
      %v1151 = vpop.f32.mrb[0].mxu0
      %v1152 = vadd.f32 %v1046, %v1151
      %v1153 = vpop.f32.mrb[0].mxu0
      %v1154 = vadd.f32 %v1051, %v1153
      %v1155 = vpop.f32.mrb[0].mxu0
      %v1156 = vadd.f32 %v1051, %v1155
      %1157 = vdwg.mxu0
      %v1158 = vmax.f32 %v1120, 0.0
      %v1159 = vmax.f32 %v1122, 0.0
      %v1160 = vmax.f32 %v1124, 0.0
      %v1161 = vmax.f32 %v1126, 0.0
      %v1162 = vmax.f32 %v1130, 0.0
      %v1163 = vmax.f32 %v1132, 0.0
      %v1164 = vmax.f32 %v1134, 0.0
      %v1165 = vmax.f32 %v1136, 0.0
      %v1166 = vmax.f32 %v1140, 0.0
      %v1167 = vmax.f32 %v1142, 0.0
      %v1168 = vmax.f32 %v1144, 0.0
      %v1169 = vmax.f32 %v1146, 0.0
      %v1170 = vmax.f32 %v1150, 0.0
      %v1171 = vmax.f32 %v1152, 0.0
      %v1172 = vmax.f32 %v1154, 0.0
      %v1173 = vmax.f32 %v1156, 0.0
      %v1174 = vld [vmem:[%s9] sm:$0x3]
      %v1175 = vpack.c.bf16 %v1160, %v1158
      %v1176 = vpack.c.bf16 %v1161, %v1159
      %v1177 = vpack.c.bf16 %v1164, %v1162
      %v1178 = vpack.c.bf16 %v1165, %v1163
      %v1179 = vpack.c.bf16 %v1168, %v1166
      %v1180 = vpack.c.bf16 %v1169, %v1167
      %v1181 = vpack.c.bf16 %v1172, %v1170
      %v1182 = vpack.c.bf16 %v1173, %v1171
      %v1183 = vld [vmem:[%s10] sm:$0xf]
      %1185 = vset.pattern.permute.xlu0 0
      %1186 = vperm.xlu0 %1185, %v1183
      %v1187 = vpop.permute.xlu0 %1186
      %v1190 = vsel %vm702, %v1174, 0
      %1192 = vmatprep.subr.bf16.mxu0 %v1176
      %1193 = vmatpush1.bf16.msra.mxu0 %v1175
      %1194 = vmatprep.subr.bf16.mxu0 %v1178
      %1195 = vmatpush1.bf16.msra.mxu0 %v1177
      %1196 = vmatprep.subr.bf16.mxu0 %v1180
      %1197 = vmatpush1.bf16.msra.mxu0 %v1179
      %1198 = vmatprep.subr.bf16.mxu0 %v1182
      %1199 = vmatpush1.bf16.msra.mxu0 %v1181
      %1200 = vmatprep.subr.bf16.mxu0 0
      %1201 = vmatpush1.bf16.msra.mxu0 0
      %1202 = vmatprep.subr.bf16.mxu0 0
      %1203 = vmatpush1.bf16.msra.mxu0 0
      %1204 = vmatprep.subr.bf16.mxu0 0
      %1205 = vmatpush1.bf16.msra.mxu0 0
      %1206 = vmatprep.subr.bf16.mxu0 0
      %1207 = vmatpush1.bf16.msra.mxu0 0
      %1208 = vmatprep.subr.bf16.mxu0 0
      %1209 = vmatpush1.bf16.msra.mxu0 0
      %1210 = vmatprep.subr.bf16.mxu0 0
      %1211 = vmatpush1.bf16.msra.mxu0 0
      %1212 = vmatprep.subr.bf16.mxu0 0
      %1213 = vmatpush1.bf16.msra.mxu0 0
      %1214 = vmatprep.subr.bf16.mxu0 0
      %1215 = vmatpush1.bf16.msra.mxu0 0
      %1216 = vmatprep.subr.bf16.mxu0 0
      %1217 = vmatpush1.bf16.msra.mxu0 0
      %1218 = vmatprep.subr.bf16.mxu0 0
      %1219 = vmatpush1.bf16.msra.mxu0 0
      %1220 = vmatprep.subr.bf16.mxu0 0
      %1221 = vmatpush1.bf16.msra.mxu0 0
      %1222 = vmatprep.subr.bf16.mxu0 0
      %1223 = vmatpush1.bf16.msra.mxu0 0
      %1224 = vmatprep.mubr.bf16.mxu0 0
      %1225 = vmatmul.mubr.bf16.gmra.mrb[0].mxu0 %v1190
      %v1226 = vpop.f32.mrb[0].mxu0
      %v1227 = vadd.f32 %v1187, %v1226
      %v1228 = vpop.f32.mrb[0].mxu0
      %v1229 = vadd.f32 %v1187, %v1228
      %v1230 = vpop.f32.mrb[0].mxu0
      %v1231 = vpop.f32.mrb[0].mxu0
      %1232 = vdwg.mxu0
      %vm1233 = vcmask 1043456
      %v1234 = vsel %vm1233, %v1227, -inf
      %v1235 = vrot.slane %v1234, 4
      %v1236 = vmax.f32 %v1234, %v1235
      %v1237 = vrot.slane %v1236, 2
      %v1238 = vmax.f32 %v1236, %v1237
      %v1239 = vrot.slane %v1238, 1
      %v1240 = vmax.f32 %v1238, %v1239
      %v1241 = vsel %vm1233, %v1229, -inf
      %v1242 = vrot.slane %v1241, 4
      %v1243 = vmax.f32 %v1241, %v1242
      %v1244 = vrot.slane %v1243, 2
      %v1245 = vmax.f32 %v1243, %v1244
      %v1246 = vrot.slane %v1245, 1
      %v1247 = vmax.f32 %v1245, %v1246
      %v1248 = vsub.f32 %v1227, %v1240
      %v1249 = vsub.f32 %v1229, %v1247
      %v1250 = vmul.f32 %v1248, 1.442695
      %v1251 = vpow.pop %v1250
      %v1252 = vmul.f32 %v1249, 1.442695
      %v1253 = vpow.pop %v1252
      %v1254 = vsel %vm1233, %v1251, 0.0
      %v1255 = vrot.slane %v1254, 4
      %v1256 = vadd.f32 %v1254, %v1255
      %v1257 = vrot.slane %v1256, 2
      %v1258 = vadd.f32 %v1256, %v1257
      %v1259 = vrot.slane %v1258, 1
      %v1260 = vadd.f32 %v1258, %v1259
      %v1261 = vsel %vm1233, %v1253, 0.0
      %v1262 = vrot.slane %v1261, 4
      %v1263 = vadd.f32 %v1261, %v1262
      %v1264 = vrot.slane %v1263, 2
      %v1265 = vadd.f32 %v1263, %v1264
      %v1266 = vrot.slane %v1265, 1
      %v1267 = vadd.f32 %v1265, %v1266
      %v1268 = vrcp.pop %v1260
      %v1269 = vmul.f32 %v1251, %v1268
      %v1270 = vrcp.pop %v1267
      %v1271 = vmul.f32 %v1253, %v1270
      %v1274 = vcombine.low %v1269, %v1271
      %1276 = vst [vmem:[%s424] sm:$0xff] %v1274
      %s1277 = smul.u32 2, %s27
      %p1278 = scmp.lt.s32.totalorder %s26, 1
      %s1279 = scalar_select %p1278, %s26, 1
      %p1280 = scmp.lt.s32.totalorder %s1277, 1
      %s1281 = scalar_select %p1280, %s1277, 1
      %s1282 = smul.addr %s1279, 2
      %s1283 = sadd.s32 %s1281, %s1282
      %s1284 = smul.addr %s1283, 4
      %s1285 = scalar_lea.vmem %s11, %s1284
      // Predicated region
      $region65: #{_lambda_.1} parent=63 // pred_check
        %p1286 = pneg %p292
      $region66: #{_lambda_.1} parent=63 // pred_check_branch
        %1288 = sbr.rel (%p1286) target = $region68
      $region67: #{_lambda_.1} parent=63 // pred_region
        %s1289 = smul.u32 2, %s27
      $region68: #{_lambda_.1} parent=63 // pred_fallthru
        _
    $region64: #{_lambda_.1} parent=5 // pred_fallthru
      _
    %p1290 = scmp.le.s32.totalorder 2, %s17
    // Predicated region
    $region69: #{_lambda_.1} parent=5 // pred_check
      %p1291 = pneg %p1290
    $region70: #{_lambda_.1} parent=5 // pred_check_branch
      %1293 = sbr.rel (%p1291) target = $region72
    $region71: #{_lambda_.1} parent=5 // pred_region
      %s1294 = ssub.s32 %s17, 2
      // Predicated region
      $region73: #{_lambda_.1} parent=71 // pred_check
        %p1295 = pneg %p298
      $region74: #{_lambda_.1} parent=71 // pred_check_branch
        %1297 = sbr.rel (%p1295) target = $region76
      $region75: #{_lambda_.1} parent=71 // pred_region
        %s1298 = smul.u32 2, %s29
        %p1299 = scmp.lt.s32.totalorder %s28, 1
        %s1300 = scalar_select %p1299, %s28, 1
        %p1301 = scmp.lt.s32.totalorder %s1298, 1
        %s1302 = scalar_select %p1301, %s1298, 1
        %s1303 = smul.addr %s1300, 2
        %s1304 = sadd.s32 %s1302, %s1303
        %s1305 = smul.addr %s1304, 4
        %s1306 = scalar_lea.vmem %s11, %s1305
      $region76: #{_lambda_.1} parent=71 // pred_fallthru
        _
    $region72: #{_lambda_.1} parent=5 // pred_fallthru
      _
  $region6: #{_lambda_.1} parent=0 // loop_footer
    %s21 = sadd.s32 1, %s17
  $region7: #{_lambda_.1} parent=0 // loop_footer_branch
    %16 = sbr.rel target = $region3
  $region8: #{_lambda_.1} parent=0 // loop_exit
    _

</llo_original>
